<compile_context>
chip_gen: v6e
topology: v6e:2x2x1
jax: 0.10.0
libtpu: 0.0.40
codegen_flags: <defaults>
</compile_context>

<pallas_src>
import jax
import jax.numpy as jnp
from jax.experimental import pallas as pl
from jax.experimental.pallas import tpu as pltpu


def _locked_dropout_kernel(x_ref, m_ref, o_ref):
    # x_ref: (tt, ft); m_ref: (1, ft) -> broadcast over the time (sublane) dim.
    o_ref[...] = x_ref[...] * m_ref[...]


_LANE = 128


def _sublane(itemsize):
    # Packed-vreg sublane multiple per dtype width: f32 -> 8, bf16 -> 16, i8/fp8 -> 32.
    return {4: 8, 2: 16, 1: 32}.get(itemsize, 8)


def _vmem_budget():
    """Return (target_tile_bytes, vmem_limit_bytes) sized per TPU generation."""
    cap = 64 * 1024 * 1024  # conservative default: v7x-class per-TC VMEM
    try:
        cap = int(getattr(pltpu.get_tpu_info(), "vmem_capacity_bytes", cap))
    except Exception:
        pass
    if cap <= 64 * 1024 * 1024:
        # v7x: 64 MiB physical per TC -> ~8 MiB x tile; 4x double-buffered
        # (x + out) + resident mask fits comfortably under a 44 MiB limit.
        return 8 * 1024 * 1024, 44 * 1024 * 1024
    # v5e / v6e: 128 MiB physical -> ~12 MiB x tile, 72 MiB scoped limit
    # (the old 4 MiB tiles already overflowed v5e's 16 MiB default limit).
    return 12 * 1024 * 1024, 72 * 1024 * 1024


def _choose_tiles(T, F, itemsize, target_bytes):
    """Pick (tt, ft): tt a multiple of the dtype sublane, ft a multiple of 128
    (or the full dim when smaller), targeting ~target_bytes per x tile.
    Partial edge blocks are handled by the cdiv grid - no full-dim fallback."""
    sub = _sublane(itemsize)
    if F <= _LANE:
        ft = F  # full (possibly unaligned) dim is a legal block dim
    else:
        ft_rows = (F // _LANE) * _LANE  # near-full rows -> contiguous DMAs
        ft_cap = max(_LANE, (target_bytes // (sub * itemsize)) // _LANE * _LANE)
        ft = min(ft_rows, ft_cap)
    rows = max(sub, target_bytes // max(ft * itemsize, 1))
    rows = (rows // sub) * sub
    if T <= sub:
        tt = T  # full (possibly unaligned) dim is a legal block dim
    else:
        tt = max(sub, min(rows, (T // sub) * sub))
    return tt, ft


def locked_dropout(x, key, dropout=0.5, training=True, donate_x=False):
    """x: (T, B, H). key: jax PRNG key. Returns same shape/dtype as x."""
    if dropout == 0.0 or not training:
        return x
    # NOTE: dropout == 1.0 is degenerate (1/keep_prob = inf) in PyTorch too.

    keep_prob = 1.0 - dropout
    T, B, H = x.shape
    F = B * H
    itemsize = x.dtype.itemsize

    # Single locked mask, sampled once, scaled by 1/keep_prob, in x.dtype.
    # TODO(synk): could be generated in-kernel per F-tile with pltpu.prng_seed /
    # prng_random_bits (seeded only by the feature-tile index so it stays locked
    # across time and megacore-safe); kept host-side since it is <1% of traffic.
    keep = jax.random.bernoulli(key, p=keep_prob, shape=(1, F))
    mask = (keep.astype(jnp.float32) * jnp.float32(1.0 / keep_prob)).astype(x.dtype)

    x2 = x.reshape(T, F)
    target_bytes, vmem_limit = _vmem_budget()
    tt, ft = _choose_tiles(T, F, itemsize, target_bytes)

    # Grid = (feature_tiles, time_tiles): time is the INNER axis, so the mask's
    # block index (0, j) is constant over the inner loop -> the ~ft*itemsize
    # mask tile stays resident in VMEM instead of being re-fetched every step.
    grid = (pl.cdiv(F, ft), pl.cdiv(T, tt))

    out2 = pl.pallas_call(
        _locked_dropout_kernel,
        out_shape=jax.ShapeDtypeStruct((T, F), x.dtype),
        grid_spec=pltpu.PrefetchScalarGridSpec(
            num_scalar_prefetch=0,
            grid=grid,
            in_specs=[
                pl.BlockSpec((tt, ft), lambda j, i: (i, j)),  # x tile
                pl.BlockSpec((1, ft), lambda j, i: (0, j)),   # mask (resident over time)
            ],
            out_specs=pl.BlockSpec((tt, ft), lambda j, i: (i, j)),
        ),
        compiler_params=pltpu.CompilerParams(
            # Pure elementwise with a read-only broadcast mask: every grid
            # point is independent -> megacore-shardable on v7x.
            dimension_semantics=("parallel", "parallel"),
            vmem_limit_bytes=vmem_limit,
        ),
        cost_estimate=pl.CostEstimate(
            flops=T * F,
            transcendentals=0,
            bytes_accessed=2 * T * F * itemsize + F * itemsize,
        ),
        # Write the result in place over x2 (halves peak HBM footprint) when
        # the caller no longer needs x -- the common case for dropout.
        input_output_aliases=({0: 0} if donate_x else {}),
    )(x2, mask)

    return out2.reshape(T, B, H)


if __name__ == "__main__":
    key = jax.random.PRNGKey(0)
    xkey, mkey = jax.random.split(key)

    T, B, H = 8, 4, 32  # (seq, batch, hidden)
    x = jax.random.normal(xkey, (T, B, H), dtype=jnp.float32)

    out = locked_dropout(x, mkey, dropout=0.5, training=True)
    out = jax.block_until_ready(out)

    # Sanity: each element is either 0 or 2*x (scale = 1/(1 - 0.5)), and the
    # dropout pattern is identical ("locked") across all timesteps.
    mask_eff = jnp.where(x != 0, out / jnp.where(x == 0, 1.0, x), 0.0)
    assert bool(jnp.allclose(mask_eff, mask_eff[0:1], atol=1e-5)), "mask not locked across time"
    assert bool(
        jnp.all((jnp.abs(mask_eff) < 1e-5) | (jnp.abs(mask_eff - 2.0) < 1e-4))
    ), "mask values not in {0, 1/keep_prob}"

    # Exercise the in-place (aliased) path on a private copy of x.
    _ = jax.block_until_ready(
        locked_dropout(jnp.array(x), mkey, dropout=0.25, training=True, donate_x=True)
    )

    # Eval-mode passthrough check (glue path).
    out_eval = jax.block_until_ready(locked_dropout(x, mkey, dropout=0.5, training=False))
    assert bool(jnp.array_equal(out_eval, x))

    print("KERNEL_OK")
</pallas_src>

<mosaic_0001>
module attributes {stable_mosaic.version = 11 : i64} {
  func.func @_locked_dropout_kernel(%arg0: i32, %arg1: i32, %arg2: memref<8x128xf32, #tpu.memory_space<vmem>>, %arg3: memref<1x128xf32, #tpu.memory_space<vmem>>, %arg4: memref<8x128xf32, #tpu.memory_space<vmem>>) attributes {dimension_semantics = [#tpu.dimension_semantics<parallel>, #tpu.dimension_semantics<parallel>], iteration_bounds = array<i64: 1, 1>, scalar_prefetch = 0 : i64, scratch_operands = 0 : i64, tpu.core_type = #tpu.core_type<tc>, window_params = [{transform_indices = @transform_0, window_bounds = array<i64: 8, 128>}, {transform_indices = @transform_1, window_bounds = array<i64: 1, 128>}, {transform_indices = @transform_2, window_bounds = array<i64: 8, 128>}]} {
    %c0 = arith.constant 0 : index
    %c0_0 = arith.constant 0 : index
    %0 = vector.load %arg2[%c0, %c0_0] : memref<8x128xf32, #tpu.memory_space<vmem>>, vector<8x128xf32>
    %c0_1 = arith.constant 0 : index
    %c0_2 = arith.constant 0 : index
    %1 = vector.load %arg3[%c0_1, %c0_2] : memref<1x128xf32, #tpu.memory_space<vmem>>, vector<1x128xf32>
    %2 = vector.broadcast %1 : vector<1x128xf32> to vector<8x128xf32>
    %3 = arith.mulf %0, %2 : vector<8x128xf32>
    %c0_3 = arith.constant 0 : index
    %c0_4 = arith.constant 0 : index
    %4 = vector.load %arg4[%c0_3, %c0_4] : memref<8x128xf32, #tpu.memory_space<vmem>>, vector<8x128xf32>
    tpu.vector_store %arg4[%c0_3, %c0_4], %3 {strides = array<i32>} : memref<8x128xf32, #tpu.memory_space<vmem>>, vector<8x128xf32>,
    return
  }
  func.func @transform_0(%arg0: i32, %arg1: i32) -> (i32, i32) {
    %c0_i32 = arith.constant 0 : i32
    return %arg1, %arg0 : i32, i32
  }
  func.func @transform_1(%arg0: i32, %arg1: i32) -> (i32, i32) {
    %c0_i32 = arith.constant 0 : i32
    %c0_i32_0 = arith.constant 0 : i32
    return %c0_i32, %arg0 : i32, i32
  }
  func.func @transform_2(%arg0: i32, %arg1: i32) -> (i32, i32) {
    %c0_i32 = arith.constant 0 : i32
    return %arg1, %arg0 : i32, i32
  }
}

</mosaic_0001>

<llo_original>
// kernel: tpu_custom_call.1
$region0: #{tpu_custom_call.1}
  #allocation0 [shape = 'u32[]', space=smem, size = 0x4, offset = 0x4, fixed_abs, tag = 'smem constant byte address 0x4 - core index']
  #allocation1 [shape = 'u32[144,128]{1,0:T(1,128)}', space=vmem, size = 0x12000, scoped, tag = 'internal scratch']
  %s0 = inlined_call_operand.hbm [shape: f32[8,128], index: 0, kind: input, shape index: {}]
  %s1 = inlined_call_operand.vmem [shape: f32[1,128], index: 1, kind: input, shape index: {}]
  %s2 = inlined_call_operand.hbm [shape: f32[8,128], index: 2, kind: output, shape index: {}]
  %s3 = sld [smem:[#allocation0]]
  $region22: #{tpu_custom_call.1} parent=0
    _
  %s5 = ssub.s32 1, %s3
  %s6 = scalar_select 0, %s5, %s3
  $region1: #{tpu_custom_call.1} parent=0
    #allocation2 [shape = 'u8[4096]{0}', space=vmem, size = 0x1000, scoped, tag = 'input window, operand 0, single buffered']
    #allocation3 [shape = 's32[1]{0}', space=sflag, size = 0x4, scoped, tag = 'scoped memory for tpu_custom_call.1']
    #allocation4 [shape = 's32[1]{0}', space=sflag, size = 0x4, scoped, tag = 'scoped memory for tpu_custom_call.1']
    #allocation5 [shape = 'u8[4096]{0}', space=vmem, size = 0x1000, scoped, tag = 'output window, operand 0, single buffered']
    %7 = vsyncpa [#allocation3], 0
    %8 = vsyncpa [#allocation4], 0
    // Predicated region
    $region2: #{tpu_custom_call.1} parent=1 // pred_check
      _
    $region3: #{tpu_custom_call.1} parent=1 // pred_check_branch
      %10 = sbr.rel (0) target = $region5
    $region4: #{tpu_custom_call.1} parent=1 // pred_region
      %s12 = ssub.s32 128, 128
      %13 = vsyncadd [#allocation3], %s12
      %s15 = sshll.u32 [#allocation2], 4
      %s16 = int_to_ptr.vmem [resolvable:$true] %s15
      %18 = dma.hbm_to_vmem [thread:$0]  %s0, 128, %s16, [#allocation3]
    $region5: #{tpu_custom_call.1} parent=1 // pred_fallthru
      _
    // Predicated region
    $region6: #{tpu_custom_call.1} parent=1 // pred_check
      _
    $region7: #{tpu_custom_call.1} parent=1 // pred_check_branch
      %20 = sbr.rel (0) target = $region9
    $region8: #{tpu_custom_call.1} parent=1 // pred_region
      _
    $region9: #{tpu_custom_call.1} parent=1 // pred_fallthru
      _
    // Predicated region
    $region10: #{tpu_custom_call.1} parent=1 // pred_check
      _
    $region11: #{tpu_custom_call.1} parent=1 // pred_check_branch
      %22 = sbr.rel (0) target = $region13
    $region12: #{tpu_custom_call.1} parent=1 // pred_region
      %23 = dma.done [#allocation3], 128
    $region13: #{tpu_custom_call.1} parent=1 // pred_fallthru
      _
    %v24 = vld [vmem:[#allocation2] sm:$0xff]
    %v25 = vld [vmem:[%s1] sm:$0x1]
    %v27 = vlaneseq
    %v28 = vshrl.u32 %v27, 7
    %v29 = vsub.s32 0, %v28
    %v30 = vrot.slane %v25, %v29
    %v32 = vmul.f32 %v24, %v30
    %33 = vst [vmem:[#allocation5] sm:$0xff] %v32
    // Predicated region
    $region14: #{tpu_custom_call.1} parent=1 // pred_check
      _
    $region15: #{tpu_custom_call.1} parent=1 // pred_check_branch
      %35 = sbr.rel (0) target = $region17
    $region16: #{tpu_custom_call.1} parent=1 // pred_region
      %s37 = ssub.s32 128, 128
      %38 = vsyncadd [#allocation4], %s37
      %s40 = sshll.u32 [#allocation5], 4
      %s41 = int_to_ptr.vmem [resolvable:$true] %s40
      %43 = dma.vmem_to_hbm [thread:$0]  %s41, 128, %s2, [#allocation4]
    $region17: #{tpu_custom_call.1} parent=1 // pred_fallthru
      _
    // Predicated region
    $region18: #{tpu_custom_call.1} parent=1 // pred_check
      _
    $region19: #{tpu_custom_call.1} parent=1 // pred_check_branch
      %45 = sbr.rel (0) target = $region21
    $region20: #{tpu_custom_call.1} parent=1 // pred_region
      %46 = dma.done [#allocation4], 128
    $region21: #{tpu_custom_call.1} parent=1 // pred_fallthru
      _
    %47 = vsyncpa [#allocation3], 1
    %48 = vsyncpa [#allocation4], 1

</llo_original>
